<compile_context>
chip_gen: v6e
topology: v6e:2x2x1
jax: 0.10.0
libtpu: 0.0.40
codegen_flags: <defaults>
</compile_context>

<pallas_src>
import functools

import jax
import jax.numpy as jnp
from jax import lax
from jax.experimental import pallas as pl
from jax.experimental.pallas import tpu as pltpu


def _ce_tile_kernel(logits_ref, labels_ref, out_ref, *, n_total, tile_n):
    """One (TILE_N, C) tile of rows; accumulates the loss sum into out_ref."""
    i = pl.program_id(0)

    # init resident (1,1) accumulator on the first grid step
    @pl.when(i == 0)
    def _():
        out_ref[...] = jnp.zeros_like(out_ref)

    # native-dtype tile; cast to f32 in vregs (cheap, VPU)
    x = logits_ref[...].astype(jnp.float32)            # (T, C)
    lbl = labels_ref[...]                               # (T, 1) int32
    t, c = x.shape

    # numerically stable log-softmax pieces; pick the label logit from z so
    # the +m / -m cancel and only z stays live.
    m = jnp.max(x, axis=-1, keepdims=True)              # (T, 1)
    z = x - m                                            # (T, C)
    lse_z = jnp.log(jnp.sum(jnp.exp(z), axis=-1, keepdims=True))  # (T, 1)

    iota_c = lax.broadcasted_iota(jnp.int32, (t, c), 1)  # (T, C)
    picked_z = jnp.sum(jnp.where(iota_c == lbl, z, 0.0),
                       axis=-1, keepdims=True)           # (T, 1)

    per_sample = lse_z - picked_z                        # (T, 1)

    # remainder masking: rows past the true N (ragged last tile / padding)
    # contribute exactly 0 to the sum.
    row = lax.broadcasted_iota(jnp.int32, (t, 1), 0) + i * tile_n
    per_sample = jnp.where(row < n_total, per_sample, 0.0)

    out_ref[...] += jnp.sum(per_sample)

    # finalize: divide by the TRUE global N (not the block-local row count)
    @pl.when(i == pl.num_programs(0) - 1)
    def _():
        out_ref[...] = out_ref[...] * jnp.float32(1.0 / n_total)


def _choose_tile_n(n, c, itemsize):
    """Largest row tile such that one logits block is ~2 MiB (safe for the
    default scoped-VMEM budget with double-buffering on v5e/v6e/v7x)."""
    target_bytes = 2 * 1024 * 1024
    rows = max(32, target_bytes // max(1, c * itemsize))
    rows = min(rows, 4096)                 # amortize ~0.35us/step, keep vregs sane
    rows = max(32, (rows // 32) * 32)      # multiple of 32: valid for f32 & bf16 tiling
    n_pad = ((n + 31) // 32) * 32
    return min(rows, n_pad)


def superpix_criterion(pred, label, *, tile_n=None):
    """Pallas equivalent of SuperPixCriterion.forward(pred, label).

    pred:  (N, C) logits, f32 or bf16 (ingested in native dtype)
    label: (N,)   int class indices
    returns scalar float32 loss (mean cross-entropy)
    """
    n, c = pred.shape
    itemsize = jnp.dtype(pred.dtype).itemsize
    if tile_n is None:
        tile_n = _choose_tile_n(n, c, itemsize)

    label2d = label.reshape(n, 1).astype(jnp.int32)
    grid = (pl.cdiv(n, tile_n),)

    kernel = functools.partial(_ce_tile_kernel, n_total=n, tile_n=tile_n)

    cost = pl.CostEstimate(
        flops=5 * n * c,                      # max, sub, exp-adjacent adds, selects, sums
        transcendentals=n * c + n,            # exp per element + log per row
        bytes_accessed=n * c * itemsize + n * 4 + 4,
    )

    out = pl.pallas_call(
        kernel,
        out_shape=jax.ShapeDtypeStruct((1, 1), jnp.float32),
        grid=grid,
        in_specs=[
            pl.BlockSpec((tile_n, c), lambda i: (i, 0)),   # logits tile
            pl.BlockSpec((tile_n, 1), lambda i: (i, 0)),   # labels tile
        ],
        # same block index every step -> output stays resident in VMEM
        out_specs=pl.BlockSpec((1, 1), lambda i: (0, 0)),
        compiler_params=pltpu.CompilerParams(
            dimension_semantics=("arbitrary",),            # shared accumulator axis
        ),
        cost_estimate=cost,
    )(pred, label2d)
    return out[0, 0]


if __name__ == "__main__":
    key = jax.random.PRNGKey(0)
    k1, k2 = jax.random.split(key)

    # small superpixel-classification shapes; N=60 with tile_n=16 exercises a
    # 4-step grid AND a ragged last tile (only 12 of 16 rows valid).
    N, C = 60, 32
    pred = jax.random.normal(k1, (N, C), dtype=jnp.float32)
    label = jax.random.randint(k2, (N,), 0, C, dtype=jnp.int32)

    loss = superpix_criterion(pred, label, tile_n=16)
    loss = jax.block_until_ready(loss)

    # pure-JAX reference (same math as torch.nn.CrossEntropyLoss, mean reduction)
    logp = jax.nn.log_softmax(pred, axis=-1)
    ref = -jnp.mean(logp[jnp.arange(N), label])
    assert jnp.allclose(loss, ref, rtol=1e-5, atol=1e-5), (loss, ref)

    # bf16 ingest path: no wrapper up-cast, cast happens inside the kernel
    pred_bf16 = pred.astype(jnp.bfloat16)
    loss_bf16 = jax.block_until_ready(
        superpix_criterion(pred_bf16, label, tile_n=16))
    logp_bf = jax.nn.log_softmax(pred_bf16.astype(jnp.float32), axis=-1)
    ref_bf = -jnp.mean(logp_bf[jnp.arange(N), label])
    assert jnp.allclose(loss_bf16, ref_bf, rtol=1e-3, atol=1e-3), (loss_bf16, ref_bf)

    print("KERNEL_OK")
</pallas_src>

<mosaic_0001>
module attributes {stable_mosaic.version = 11 : i64} {
  func.func @_ce_tile_kernel(%arg0: i32, %arg1: memref<16x32xf32, #tpu.memory_space<vmem>>, %arg2: memref<16x1xi32, #tpu.memory_space<vmem>>, %arg3: memref<1x1xf32, #tpu.memory_space<vmem>>) attributes {dimension_semantics = [#tpu.dimension_semantics<arbitrary>], iteration_bounds = array<i64: 4>, scalar_prefetch = 0 : i64, scratch_operands = 0 : i64, tpu.core_type = #tpu.core_type<tc>, window_params = [{transform_indices = @transform_0, window_bounds = array<i64: 16, 32>}, {transform_indices = @transform_1, window_bounds = array<i64: 16, 1>}, {pipeline_mode = #tpu.pipeline_mode<synchronous>, transform_indices = @transform_2, window_bounds = array<i64: 1, 1>}]} {
    %c0_i32 = arith.constant 0 : i32
    %0 = arith.cmpi eq, %arg0, %c0_i32 : i32
    %1 = arith.extui %0 : i1 to i32
    %c0_i32_0 = arith.constant 0 : i32
    %2 = arith.cmpi ne, %1, %c0_i32_0 : i32
    scf.if %2 {
      %cst_14 = arith.constant 0.000000e+00 : f32
      %40 = vector.broadcast %cst_14 : f32 to vector<1x1xf32>
      %c0_15 = arith.constant 0 : index
      %c0_16 = arith.constant 0 : index
      %41 = vector.load %arg3[%c0_15, %c0_16] : memref<1x1xf32, #tpu.memory_space<vmem>>, vector<1x1xf32>
      tpu.vector_store %arg3[%c0_15, %c0_16], %40 {strides = array<i32>} : memref<1x1xf32, #tpu.memory_space<vmem>>, vector<1x1xf32>,
    } else {
    }
    %c0 = arith.constant 0 : index
    %c0_1 = arith.constant 0 : index
    %3 = vector.load %arg1[%c0, %c0_1] : memref<16x32xf32, #tpu.memory_space<vmem>>, vector<16x32xf32>
    %c0_2 = arith.constant 0 : index
    %c0_3 = arith.constant 0 : index
    %4 = vector.load %arg2[%c0_2, %c0_3] : memref<16x1xi32, #tpu.memory_space<vmem>>, vector<16x1xi32>
    %cst = arith.constant dense<0xFF800000> : vector<16xf32>
    %5 = vector.multi_reduction <maximumf>, %3, %cst [1] : vector<16x32xf32> to vector<16xf32>
    %6 = vector.shape_cast %5 : vector<16xf32> to vector<16x1xf32>
    %7 = vector.broadcast %6 : vector<16x1xf32> to vector<16x32xf32>
    %8 = arith.subf %3, %7 : vector<16x32xf32>
    %9 = math.exp %8 : vector<16x32xf32>
    %cst_4 = arith.constant dense<0.000000e+00> : vector<16xf32>
    %10 = vector.multi_reduction <add>, %9, %cst_4 [1] : vector<16x32xf32> to vector<16xf32>
    %11 = vector.shape_cast %10 : vector<16xf32> to vector<16x1xf32>
    %12 = math.log %11 : vector<16x1xf32>
    %13 = tpu.iota {dimensions = array<i32: 1>} : vector<16x32xi32>
    %14 = vector.broadcast %4 : vector<16x1xi32> to vector<16x32xi32>
    %15 = arith.cmpi eq, %13, %14 : vector<16x32xi32>
    %cst_5 = arith.constant 0.000000e+00 : f32
    %16 = vector.broadcast %cst_5 : f32 to vector<16x32xf32>
    %17 = arith.select %15, %8, %16 : vector<16x32xi1>, vector<16x32xf32>
    %cst_6 = arith.constant dense<0.000000e+00> : vector<16xf32>
    %18 = vector.multi_reduction <add>, %17, %cst_6 [1] : vector<16x32xf32> to vector<16xf32>
    %19 = vector.shape_cast %18 : vector<16xf32> to vector<16x1xf32>
    %20 = arith.subf %12, %19 : vector<16x1xf32>
    %21 = tpu.iota {dimensions = array<i32: 0>} : vector<16x1xi32>
    %c16_i32 = arith.constant 16 : i32
    %22 = arith.muli %arg0, %c16_i32 : i32
    %23 = vector.broadcast %22 : i32 to vector<16x1xi32>
    %24 = arith.addi %21, %23 : vector<16x1xi32>
    %c60_i32 = arith.constant 60 : i32
    %25 = vector.broadcast %c60_i32 : i32 to vector<16x1xi32>
    %26 = arith.cmpi slt, %24, %25 : vector<16x1xi32>
    %cst_7 = arith.constant 0.000000e+00 : f32
    %27 = vector.broadcast %cst_7 : f32 to vector<16x1xf32>
    %28 = arith.select %26, %20, %27 : vector<16x1xi1>, vector<16x1xf32>
    %c0_8 = arith.constant 0 : index
    %c0_9 = arith.constant 0 : index
    %29 = vector.load %arg3[%c0_8, %c0_9] : memref<1x1xf32, #tpu.memory_space<vmem>>, vector<1x1xf32>
    %30 = vector.shape_cast %28 : vector<16x1xf32> to vector<1x16x1xf32>
    %cst_10 = arith.constant dense<0.000000e+00> : vector<1xf32>
    %31 = vector.multi_reduction <add>, %30, %cst_10 [1, 2] : vector<1x16x1xf32> to vector<1xf32>
    %32 = vector.shape_cast %31 : vector<1xf32> to vector<1x1x1xf32>
    %33 = vector.extract %32[0, 0, 0] : f32 from vector<1x1x1xf32>
    %34 = vector.broadcast %33 : f32 to vector<1x1xf32>
    %35 = arith.addf %29, %34 : vector<1x1xf32>
    %c0_11 = arith.constant 0 : index
    %c0_12 = arith.constant 0 : index
    %36 = vector.load %arg3[%c0_11, %c0_12] : memref<1x1xf32, #tpu.memory_space<vmem>>, vector<1x1xf32>
    tpu.vector_store %arg3[%c0_11, %c0_12], %35 {strides = array<i32>} : memref<1x1xf32, #tpu.memory_space<vmem>>, vector<1x1xf32>,
    %c3_i32 = arith.constant 3 : i32
    %37 = arith.cmpi eq, %arg0, %c3_i32 : i32
    %38 = arith.extui %37 : i1 to i32
    %c0_i32_13 = arith.constant 0 : i32
    %39 = arith.cmpi ne, %38, %c0_i32_13 : i32
    scf.if %39 {
      %c0_14 = arith.constant 0 : index
      %c0_15 = arith.constant 0 : index
      %40 = vector.load %arg3[%c0_14, %c0_15] : memref<1x1xf32, #tpu.memory_space<vmem>>, vector<1x1xf32>
      %cst_16 = arith.constant 0.0166666675 : f32
      %41 = vector.broadcast %cst_16 : f32 to vector<1x1xf32>
      %42 = arith.mulf %40, %41 : vector<1x1xf32>
      %c0_17 = arith.constant 0 : index
      %c0_18 = arith.constant 0 : index
      %43 = vector.load %arg3[%c0_17, %c0_18] : memref<1x1xf32, #tpu.memory_space<vmem>>, vector<1x1xf32>
      tpu.vector_store %arg3[%c0_17, %c0_18], %42 {strides = array<i32>} : memref<1x1xf32, #tpu.memory_space<vmem>>, vector<1x1xf32>,
    } else {
    }
    return
  }
  func.func @transform_0(%arg0: i32) -> (i32, i32) {
    %c0_i32 = arith.constant 0 : i32
    %c0_i32_0 = arith.constant 0 : i32
    return %arg0, %c0_i32 : i32, i32
  }
  func.func @transform_1(%arg0: i32) -> (i32, i32) {
    %c0_i32 = arith.constant 0 : i32
    %c0_i32_0 = arith.constant 0 : i32
    return %arg0, %c0_i32 : i32, i32
  }
  func.func @transform_2(%arg0: i32) -> (i32, i32) {
    %c0_i32 = arith.constant 0 : i32
    %c0_i32_0 = arith.constant 0 : i32
    %c0_i32_1 = arith.constant 0 : i32
    return %c0_i32, %c0_i32_0 : i32, i32
  }
}

</mosaic_0001>

<llo_original>
// kernel: tpu_custom_call.1
$region0: #{tpu_custom_call.1}
  #allocation0 [shape = 'u32[]', space=smem, size = 0x4, offset = 0x4, fixed_abs, tag = 'smem constant byte address 0x4 - core index']
  #allocation1 [shape = 'u32[144,128]{1,0:T(1,128)}', space=vmem, size = 0x12000, scoped, tag = 'internal scratch']
  %s0 = inlined_call_operand.vmem [shape: f32[60,32], index: 0, kind: input, shape index: {}]
  %s1 = inlined_call_operand.vmem [shape: s32[60,1], index: 1, kind: input, shape index: {}]
  %s2 = inlined_call_operand.hbm [shape: f32[1,1], index: 2, kind: output, shape index: {}]
  %s3 = sld [smem:[#allocation0]]
  $region49: #{tpu_custom_call.1} parent=0
    _
  %s5 = ssub.s32 1, %s3
  %s6 = scalar_select 0, %s5, %s3
  $region1: #{tpu_custom_call.1} parent=0
    #allocation2 [shape = 'u8[512]{0}', space=vmem, size = 0x400, scoped, tag = 'output window, operand 0, single buffered']
    #allocation3 [shape = 's32[2]{0}', space=sflag, size = 0x8, scoped, tag = 'scoped memory for tpu_custom_call.1']
    %7 = vsyncpa [#allocation3], 0
    loop: start=0, step=1, limit=6
    $region2: #{tpu_custom_call.1} parent=1 // loop_pre_header
      _
    $region3: #{tpu_custom_call.1} parent=1 // loop_header
      %s9 = sphi 0, %s13
      %p10 = scmp.ge.s32.totalorder %s9, 6
      %s19 = sphi 0, %s21
      %s22 = sphi 0, %s19
      %s23 = sphi 0, %s22
      %s39 = sphi 0, %s23
      %s45 = sphi 0, %s47
      %s48 = sphi 0, %s45
      %s49 = sphi 0, %s48
      %s65 = sphi 0, %s49
      %s69 = sphi 0, %s69
      %s71 = sphi 0, %s69
      %s72 = sphi 0, %s71
      %s86 = sphi 0, %s72
    $region4: #{tpu_custom_call.1} parent=1 // loop_header_branch
      %12 = sbr.rel (%p10) target = $region8
    $region5: #{tpu_custom_call.1} parent=1 // loop_body
      %s14 = ssub.s32 %s9, 1
      %s15 = ssub.s32 %s9, 2
      %s16 = sadd.s32 %s9, 1
      %s17 = ssub.s32 %s9, %s16
      %p18 = scmp.eq.s32.totalorder %s17, 0
      %s20 = sadd.s32 %s19, 1
      %s21 = scalar_select %p18, %s19, %s20
      %p24 = pneg %p18
      %p25 = scmp.eq.s32.totalorder %s9, 3
      %p26 = por %p24, %p25
      %p27 = scmp.ne.s32.totalorder %s19, %s22
      %p28 = scmp.eq.s32.totalorder %s9, 0
      %p29 = por %p27, %p28
      %p30 = scmp.ne.s32.totalorder %s19, %s22
      %p31 = scmp.eq.s32.totalorder %s14, 3
      %p32 = por %p30, %p31
      %p33 = scmp.ne.s32.totalorder %s22, %s23
      %p34 = scmp.eq.s32.totalorder %s14, 0
      %p35 = por %p33, %p34
      %p36 = scmp.ne.s32.totalorder %s22, %s23
      %p37 = scmp.eq.s32.totalorder %s15, 3
      %p38 = por %p36, %p37
      %p40 = scmp.ne.s32.totalorder %s23, %s39
      %p41 = scmp.eq.s32.totalorder %s15, 0
      %p42 = por %p40, %p41
      %s43 = ssub.s32 %s9, %s16
      %p44 = scmp.eq.s32.totalorder %s43, 0
      %s46 = sadd.s32 %s45, 1
      %s47 = scalar_select %p44, %s45, %s46
      %p50 = pneg %p44
      %p51 = scmp.eq.s32.totalorder %s9, 3
      %p52 = por %p50, %p51
      %p53 = scmp.ne.s32.totalorder %s45, %s48
      %p54 = scmp.eq.s32.totalorder %s9, 0
      %p55 = por %p53, %p54
      %p56 = scmp.ne.s32.totalorder %s45, %s48
      %p57 = scmp.eq.s32.totalorder %s14, 3
      %p58 = por %p56, %p57
      %p59 = scmp.ne.s32.totalorder %s48, %s49
      %p60 = scmp.eq.s32.totalorder %s14, 0
      %p61 = por %p59, %p60
      %p62 = scmp.ne.s32.totalorder %s48, %s49
      %p63 = scmp.eq.s32.totalorder %s15, 3
      %p64 = por %p62, %p63
      %p66 = scmp.ne.s32.totalorder %s49, %s65
      %p67 = scmp.eq.s32.totalorder %s15, 0
      %p68 = por %p66, %p67
      %s70 = sadd.s32 %s69, 1
      %p73 = scmp.eq.s32.totalorder %s9, 3
      %p74 = scmp.ne.s32.totalorder %s69, %s71
      %p75 = scmp.eq.s32.totalorder %s9, 0
      %p76 = por %p74, %p75
      %p77 = scmp.ne.s32.totalorder %s69, %s71
      %p78 = scmp.eq.s32.totalorder %s14, 3
      %p79 = por %p77, %p78
      %p80 = scmp.ne.s32.totalorder %s71, %s72
      %p81 = scmp.eq.s32.totalorder %s14, 0
      %p82 = por %p80, %p81
      %p83 = scmp.ne.s32.totalorder %s71, %s72
      %p84 = scmp.eq.s32.totalorder %s15, 3
      %p85 = por %p83, %p84
      %p87 = scmp.ne.s32.totalorder %s72, %s86
      %p88 = scmp.eq.s32.totalorder %s15, 0
      %p89 = por %p87, %p88
      %p90 = scmp.le.s32.totalorder 1, %s9
      %p91 = scmp.lt.s32.totalorder %s9, 5
      %p92 = pnand %p90, %p91
      %p93 = pneg %p92
      // Predicated region
      $region9: #{tpu_custom_call.1} parent=5 // pred_check
        _
      $region10: #{tpu_custom_call.1} parent=5 // pred_check_branch
        %95 = sbr.rel (%p92) target = $region12
      $region11: #{tpu_custom_call.1} parent=5 // pred_region
        %s96 = ssub.s32 %s9, 1
      $region12: #{tpu_custom_call.1} parent=5 // pred_fallthru
        _
      %p97 = scmp.lt.s32.totalorder %s9, 4
      // Predicated region
      $region13: #{tpu_custom_call.1} parent=5 // pred_check
        %p98 = pneg %p97
      $region14: #{tpu_custom_call.1} parent=5 // pred_check_branch
        %100 = sbr.rel (%p98) target = $region16
      $region15: #{tpu_custom_call.1} parent=5 // pred_region
        // Predicated region
        $region17: #{tpu_custom_call.1} parent=15 // pred_check
          %p101 = pneg %p29
        $region18: #{tpu_custom_call.1} parent=15 // pred_check_branch
          %103 = sbr.rel (%p101) target = $region20
        $region19: #{tpu_custom_call.1} parent=15 // pred_region
          %s104 = smul.u32 2, %s9
          %p105 = scmp.lt.s32.totalorder %s104, 7
          %s106 = scalar_select %p105, %s104, 7
          %s107 = smul.addr %s106, 8
          %s108 = scalar_lea.vmem %s0, %s107
          %s109 = smul.u32 2, %s9
        $region20: #{tpu_custom_call.1} parent=15 // pred_fallthru
          _
        // Predicated region
        $region21: #{tpu_custom_call.1} parent=15 // pred_check
          %p110 = pneg %p55
        $region22: #{tpu_custom_call.1} parent=15 // pred_check_branch
          %112 = sbr.rel (%p110) target = $region24
        $region23: #{tpu_custom_call.1} parent=15 // pred_region
          %s113 = smul.u32 2, %s9
          %p114 = scmp.lt.s32.totalorder %s113, 7
          %s115 = scalar_select %p114, %s113, 7
          %s116 = smul.addr %s115, 8
          %s117 = scalar_lea.vmem %s1, %s116
          %s118 = smul.u32 2, %s9
        $region24: #{tpu_custom_call.1} parent=15 // pred_fallthru
          _
      $region16: #{tpu_custom_call.1} parent=5 // pred_fallthru
        _
      %p119 = scmp.le.s32.totalorder 1, %s9
      %p120 = scmp.lt.s32.totalorder %s9, 5
      %p121 = pnand %p119, %p120
      %p122 = pneg %p121
      // Predicated region
      $region25: #{tpu_custom_call.1} parent=5 // pred_check
        _
      $region26: #{tpu_custom_call.1} parent=5 // pred_check_branch
        %124 = sbr.rel (%p121) target = $region28
      $region27: #{tpu_custom_call.1} parent=5 // pred_region
        %s125 = ssub.s32 %s9, 1
        %s126 = smul.u32 2, %s14
        %p127 = scmp.lt.s32.totalorder %s126, 7
        %s128 = scalar_select %p127, %s126, 7
        %s129 = smul.addr %s128, 8
        %s130 = scalar_lea.vmem %s0, %s129
        %p131 = pneg %p35
        %p132 = pneg %p32
        %s133 = smul.u32 2, %s14
        %p134 = scmp.lt.s32.totalorder %s133, 7
        %s135 = scalar_select %p134, %s133, 7
        %s136 = smul.addr %s135, 8
        %s137 = scalar_lea.vmem %s1, %s136
        %p138 = pneg %p61
        %p139 = pneg %p58
        %p140 = pneg %p82
        %p141 = pneg %p79
        %s142 = smul.u32 2, %s14
        %p143 = scmp.lt.s32.totalorder %s142, 7
        %s144 = scalar_select %p143, %s142, 7
        %s145 = smul.addr %s144, 8
        %s146 = scalar_lea.vmem %s0, %s145
        %s147 = smul.u32 2, %s14
        %s148 = smul.u32 2, %s14
        %p149 = scmp.lt.s32.totalorder %s148, 7
        %s150 = scalar_select %p149, %s148, 7
        %s151 = smul.addr %s150, 8
        %s152 = scalar_lea.vmem %s1, %s151
        %s153 = smul.u32 2, %s14
        %p154 = scmp.eq.s32.totalorder %s14, 0
        // Predicated region
        $region29: #{tpu_custom_call.1} parent=27 // pred_check
          %p155 = pneg %p154
        $region30: #{tpu_custom_call.1} parent=27 // pred_check_branch
          %157 = sbr.rel (%p155) target = $region32
        $region31: #{tpu_custom_call.1} parent=27 // pred_region
          %vm158 = vcmask 0
          %159 = vst.msk [vmem:[#allocation2] sm:$0x1] %vm158, 0.0
        $region32: #{tpu_custom_call.1} parent=27 // pred_fallthru
          _
        %v160 = vld [vmem:[%s146] sm:$0xff]
        %v161 = vld [vmem:[%s146 + $0x8] sm:$0xff]
        %v162 = vld [vmem:[%s152] sm:$0xff]
        %v163 = vld [vmem:[%s152 + $0x8] sm:$0xff]
        %vm164 = vcmask 261120
        %v165 = vsel %vm164, %v160, -inf
        %166 = vmax.xlane.f32.xlu0 %v165
        %v167 = vpop.xlane.xlu0 %166
        %v168 = vsel %vm164, %v161, -inf
        %169 = vmax.xlane.f32.xlu0 %v168
        %v170 = vpop.xlane.xlu0 %169
        %v171 = vsub.f32 %v160, %v167
        %v172 = vsub.f32 %v161, %v170
        %v173 = vmul.f32 %v171, 1.442695
        %v174 = vpow.pop %v173
        %v175 = vmul.f32 %v172, 1.442695
        %v176 = vpow.pop %v175
        %v177 = vsel %vm164, %v174, 0.0
        %178 = vadd.xlane.f32.xlu0 %v177
        %v179 = vpop.xlane.xlu0 %178
        %v180 = vsel %vm164, %v176, 0.0
        %181 = vadd.xlane.f32.xlu0 %v180
        %v182 = vpop.xlane.xlu0 %181
        %v183 = vlog2.pop %v179
        %v184 = vmul.f32 %v183, 0.6931472
        %v185 = vlog2.pop %v182
        %v186 = vmul.f32 %v185, 0.6931472
        %v187 = vlaneseq
        %v188 = vand.u32 %v187, 127
        %189 = vset.pattern.permute.xlu0 0
        %190 = vperm.xlu0 %189, %v162
        %v191 = vpop.permute.xlu0 %190
        %192 = vset.pattern.permute.xlu0 0
        %193 = vperm.xlu0 %192, %v163
        %v194 = vpop.permute.xlu0 %193
        %vm195 = vcmp.eq.s32.totalorder %v188, %v191
        %vm196 = vcmp.eq.s32.totalorder %v188, %v194
        %v197 = vsel %vm195, %v171, 0.0
        %v198 = vsel %vm196, %v172, 0.0
        %v199 = vsel %vm164, %v197, 0.0
        %200 = vadd.xlane.f32.xlu0 %v199
        %v201 = vpop.xlane.xlu0 %200
        %v202 = vsel %vm164, %v198, 0.0
        %203 = vadd.xlane.f32.xlu0 %v202
        %v204 = vpop.xlane.xlu0 %203
        %v205 = vsub.f32 %v184, %v201
        %v206 = vsub.f32 %v186, %v204
        %v207 = vlaneseq
        %v208 = vshrl.u32 %v207, 7
        %v209 = vadd.s32 %v208, 8
        %s210 = smul.u32 %s14, 16
        %v211 = vstv %s210
        %v212 = vadd.s32 %v208, %v211
        %v213 = vadd.s32 %v209, %v211
        %vm214 = vcmp.lt.s32.totalorder %v212, 60
        %vm215 = vcmp.lt.s32.totalorder %v213, 60
        %v216 = vsel %vm214, %v205, 0.0
        %v217 = vsel %vm215, %v206, 0.0
        %v218 = vld [vmem:[#allocation2] sm:$0x1]
        %vm219 = vcmask 7168
        %v220 = vsel %vm219, %v216, 0.0
        %v221 = vsel %vm219, %v217, 0.0
        %v222 = vadd.f32 %v220, %v221
        %223 = vadd.xlane.f32.xlu0 %v222
        %v224 = vpop.xlane.xlu0 %223
        %v225 = vrot.slane %v224, 4
        %v226 = vadd.f32 %v224, %v225
        %v227 = vrot.slane %v226, 2
        %v228 = vadd.f32 %v226, %v227
        %v229 = vrot.slane %v228, 1
        %v230 = vadd.f32 %v228, %v229
        %s231 = vtos %v230
        %v232 = vstv %s231
        %v233 = vadd.f32 %v218, %v232
        %vm234 = vcmask 0
        %235 = vst.msk [vmem:[#allocation2] sm:$0x1] %vm234, %v233
        %p236 = scmp.eq.s32.totalorder %s14, 3
        // Predicated region
        $region33: #{tpu_custom_call.1} parent=27 // pred_check
          %p237 = pneg %p236
        $region34: #{tpu_custom_call.1} parent=27 // pred_check_branch
          %239 = sbr.rel (%p237) target = $region36
        $region35: #{tpu_custom_call.1} parent=27 // pred_region
          %v240 = vld [vmem:[#allocation2] sm:$0x1]
          %v241 = vmul.f32 %v240, 0.016666668
          %242 = vst.msk [vmem:[#allocation2] sm:$0x1] %vm234, %v241
        $region36: #{tpu_custom_call.1} parent=27 // pred_fallthru
          _
        // Predicated region
        $region37: #{tpu_custom_call.1} parent=27 // pred_check
          %p243 = pneg %p79
        $region38: #{tpu_custom_call.1} parent=27 // pred_check_branch
          %245 = sbr.rel (%p243) target = $region40
        $region39: #{tpu_custom_call.1} parent=27 // pred_region
          %s247 = ssub.s32 16, 16
          %248 = vsyncadd [#allocation3], %s247
          %s250 = sshll.u32 [#allocation2], 4
          %s251 = int_to_ptr.vmem [resolvable:$true] %s250
          %253 = dma.vmem_to_hbm [thread:$0]  %s251, 16, %s2, [#allocation3]
        $region40: #{tpu_custom_call.1} parent=27 // pred_fallthru
          _
        // Predicated region
        $region41: #{tpu_custom_call.1} parent=27 // pred_check
          %p254 = pneg %p79
        $region42: #{tpu_custom_call.1} parent=27 // pred_check_branch
          %256 = sbr.rel (%p254) target = $region44
        $region43: #{tpu_custom_call.1} parent=27 // pred_region
          %257 = dma.done [#allocation3], 16
        $region44: #{tpu_custom_call.1} parent=27 // pred_fallthru
          _
      $region28: #{tpu_custom_call.1} parent=5 // pred_fallthru
        _
      %p258 = scmp.le.s32.totalorder 2, %s9
      // Predicated region
      $region45: #{tpu_custom_call.1} parent=5 // pred_check
        %p259 = pneg %p258
      $region46: #{tpu_custom_call.1} parent=5 // pred_check_branch
        %261 = sbr.rel (%p259) target = $region48
      $region47: #{tpu_custom_call.1} parent=5 // pred_region
        %s262 = ssub.s32 %s9, 2
      $region48: #{tpu_custom_call.1} parent=5 // pred_fallthru
        _
    $region6: #{tpu_custom_call.1} parent=1 // loop_footer
      %s13 = sadd.s32 1, %s9
    $region7: #{tpu_custom_call.1} parent=1 // loop_footer_branch
      %8 = sbr.rel target = $region3
    $region8: #{tpu_custom_call.1} parent=1 // loop_exit
      _
    %263 = vsyncpa [#allocation3], 1
    %s264 = scalar_lea.sflag [#allocation3], 1
    %265 = vsyncpa %s264, 1

</llo_original>
